<compile_context>
chip_gen: v7x
topology: tpu7x:2x2x1
jax: 0.10.0
libtpu: 0.0.40
codegen_flags: <defaults>
</compile_context>

<pallas_src>
import functools

import jax
import jax.numpy as jnp
from jax.experimental import pallas as pl
from jax.experimental.pallas import tpu as pltpu


def _inverse_mse_kernel(f1_ref, f2_ref, out_ref, *, batch, block_rows, ragged):
    # Per-tile upcast (inputs may arrive as bf16); all math in f32.
    f1 = f1_ref[...].astype(jnp.float32)
    f2 = f2_ref[...].astype(jnp.float32)

    # Three lane-axis reductions per tile; never materialize nf1/nf2/diff.
    ss1 = jnp.sum(f1 * f1, axis=1, keepdims=True)
    ss2 = jnp.sum(f2 * f2, axis=1, keepdims=True)
    dot = jnp.sum(f1 * f2, axis=1, keepdims=True)

    # rsqrt-then-multiply instead of sqrt-then-divide (exact lowering).
    cos = dot * jax.lax.rsqrt(ss1) * jax.lax.rsqrt(ss2)
    row_sum = 2.0 - 2.0 * cos  # (block_rows, 1): sum_d (nf1 - nf2)^2 per row

    if ragged:
        # Only traced when batch % block_rows != 0.  Must remain a true
        # select: padded tail rows yield rsqrt(0)=inf and 0*inf=NaN upstream.
        rows = pl.program_id(0) * block_rows + jax.lax.broadcasted_iota(
            jnp.int32, (block_rows, 1), 0
        )
        row_sum = jnp.where(rows < batch, row_sum, 0.0)

    # Per-block partial sum, broadcast over a layout-legal (1, 8, 128) tile.
    out_ref[...] = jnp.broadcast_to(jnp.sum(row_sum), out_ref.shape)


def _vmem_capacity_bytes():
    try:
        return int(pltpu.get_tpu_info().vmem_capacity_bytes)
    except Exception:
        # Conservative fallback (assume the smallest VMEM generation, v7x).
        return 64 * 1024 * 1024


def _min_sublane_rows(dtype):
    itemsize = jnp.dtype(dtype).itemsize
    # f32 -> 8, bf16 -> 16, int8/fp8 -> 32 (sub-32-bit packs along sublanes).
    return max(8, 32 // max(1, itemsize))


def _choose_block_rows(batch, dim, dtype, budget_bytes, min_rows):
    itemsize = jnp.dtype(dtype).itemsize
    # 2 inputs x 2 pipeline buffers; plus live f32 upcast/product temporaries
    # when the inputs are sub-32-bit.
    per_row = 4 * dim * itemsize
    if itemsize < 4:
        per_row += 3 * dim * 4
    tb = budget_bytes // per_row
    tb = max(min_rows, (tb // min_rows) * min_rows)
    padded_batch = pl.cdiv(batch, min_rows) * min_rows
    return int(min(tb, padded_batch))


def inverse_mse(fea1, fea2, *, block_rows=None):
    """Pallas TPU equivalent of the PyTorch `inverse_mse.forward`.

    fea1, fea2: (B, D) float arrays (f32 or bf16). Returns a float32 scalar.
    """
    assert fea1.shape == fea2.shape and fea1.ndim == 2
    assert fea1.dtype == fea2.dtype
    batch, dim = fea1.shape

    # Generation-aware budgets: big tiles on v5e/v6e (128 MiB VMEM), smaller
    # on v7x (64 MiB VMEM).
    vmem_cap = _vmem_capacity_bytes()
    if vmem_cap >= 100 * 1024 * 1024:        # v5e / v6e
        input_budget = 24 * 1024 * 1024
        vmem_limit = 64 * 1024 * 1024
    else:                                     # v7x
        input_budget = 12 * 1024 * 1024
        vmem_limit = 40 * 1024 * 1024
    vmem_limit = min(vmem_limit, vmem_cap)

    min_rows = _min_sublane_rows(fea1.dtype)
    if block_rows is None:
        tb = _choose_block_rows(batch, dim, fea1.dtype, input_budget, min_rows)
    else:
        tb = max(min_rows, (int(block_rows) // min_rows) * min_rows)

    num_blocks = int(pl.cdiv(batch, tb))
    ragged = (batch % tb) != 0

    kernel = functools.partial(
        _inverse_mse_kernel, batch=batch, block_rows=tb, ragged=ragged
    )

    partials = pl.pallas_call(
        kernel,
        out_shape=jax.ShapeDtypeStruct((num_blocks, 8, 128), jnp.float32),
        grid=(num_blocks,),
        in_specs=[
            pl.BlockSpec((tb, dim), lambda i: (i, 0)),
            pl.BlockSpec((tb, dim), lambda i: (i, 0)),
        ],
        out_specs=pl.BlockSpec((1, 8, 128), lambda i: (i, 0, 0)),
        compiler_params=pltpu.CompilerParams(
            # Per-block independent partial sums -> parallel (megacore on v7x).
            dimension_semantics=("parallel",),
            vmem_limit_bytes=vmem_limit,
        ),
    )(fea1, fea2)

    # MSELoss(reduction='mean') over ALL B*D elements, negated.
    total = jnp.sum(partials[:, 0, 0])
    return -(total / jnp.float32(batch * dim))


def _reference(fea1, fea2):
    # Pure-JAX reference matching the PyTorch forward exactly.
    n1 = jnp.linalg.norm(fea1, axis=1, keepdims=True)
    n2 = jnp.linalg.norm(fea2, axis=1, keepdims=True)
    return -jnp.mean((fea1 / n1 - fea2 / n2) ** 2)


if __name__ == "__main__":
    key = jax.random.PRNGKey(0)

    cases = [
        # (B, D, explicit block_rows or None, dtype)
        (8, 128, None, jnp.float32),    # single aligned block
        (12, 128, 8, jnp.float32),      # ragged batch: 2 blocks, masked tail
        (24, 256, 8, jnp.float32),      # multi-block, exact tiling, parallel
        (16, 256, None, jnp.bfloat16),  # bf16 path, aligned
        (24, 128, 16, jnp.bfloat16),    # bf16 path, ragged (16-row sublane min)
    ]

    all_ok = True
    for b, d, tb, dt in cases:
        k1, k2 = jax.random.split(jax.random.fold_in(key, b * 1000 + d))
        fea1 = jax.random.normal(k1, (b, d), dtype=jnp.float32).astype(dt)
        fea2 = jax.random.normal(k2, (b, d), dtype=jnp.float32).astype(dt)

        out = jax.block_until_ready(inverse_mse(fea1, fea2, block_rows=tb))
        ref = jax.block_until_ready(
            _reference(fea1.astype(jnp.float32), fea2.astype(jnp.float32))
        )
        tol = 1e-6 if dt == jnp.float32 else 1e-5
        ok = bool(jnp.allclose(out, ref, rtol=1e-4, atol=tol))
        assert ok, (b, d, tb, dt, out, ref)
        all_ok &= ok

    if all_ok:
        print("KERNEL_OK")
</pallas_src>

<mosaic_0001>
module attributes {stable_mosaic.version = 11 : i64} {
  func.func @_inverse_mse_kernel(%arg0: i32, %arg1: memref<8x128xf32, #tpu.memory_space<vmem>>, %arg2: memref<8x128xf32, #tpu.memory_space<vmem>>, %arg3: memref<1x8x128xf32, #tpu.memory_space<vmem>>) attributes {dimension_semantics = [#tpu.dimension_semantics<parallel>], iteration_bounds = array<i64: 1>, scalar_prefetch = 0 : i64, scratch_operands = 0 : i64, tpu.core_type = #tpu.core_type<tc>, window_params = [{transform_indices = @transform_0, window_bounds = array<i64: 8, 128>}, {transform_indices = @transform_1, window_bounds = array<i64: 8, 128>}, {transform_indices = @transform_2, window_bounds = array<i64: 1, 8, 128>}]} {
    %c0 = arith.constant 0 : index
    %c0_0 = arith.constant 0 : index
    %0 = vector.load %arg1[%c0, %c0_0] : memref<8x128xf32, #tpu.memory_space<vmem>>, vector<8x128xf32>
    %c0_1 = arith.constant 0 : index
    %c0_2 = arith.constant 0 : index
    %1 = vector.load %arg2[%c0_1, %c0_2] : memref<8x128xf32, #tpu.memory_space<vmem>>, vector<8x128xf32>
    %2 = arith.mulf %0, %0 : vector<8x128xf32>
    %cst = arith.constant dense<0.000000e+00> : vector<8xf32>
    %3 = vector.multi_reduction <add>, %2, %cst [1] : vector<8x128xf32> to vector<8xf32>
    %4 = vector.shape_cast %3 : vector<8xf32> to vector<8x1xf32>
    %5 = arith.mulf %1, %1 : vector<8x128xf32>
    %cst_3 = arith.constant dense<0.000000e+00> : vector<8xf32>
    %6 = vector.multi_reduction <add>, %5, %cst_3 [1] : vector<8x128xf32> to vector<8xf32>
    %7 = vector.shape_cast %6 : vector<8xf32> to vector<8x1xf32>
    %8 = arith.mulf %0, %1 : vector<8x128xf32>
    %cst_4 = arith.constant dense<0.000000e+00> : vector<8xf32>
    %9 = vector.multi_reduction <add>, %8, %cst_4 [1] : vector<8x128xf32> to vector<8xf32>
    %10 = vector.shape_cast %9 : vector<8xf32> to vector<8x1xf32>
    %11 = math.rsqrt %4 : vector<8x1xf32>
    %12 = arith.mulf %10, %11 : vector<8x1xf32>
    %13 = math.rsqrt %7 : vector<8x1xf32>
    %14 = arith.mulf %12, %13 : vector<8x1xf32>
    %cst_5 = arith.constant 2.000000e+00 : f32
    %15 = vector.broadcast %cst_5 : f32 to vector<8x1xf32>
    %16 = arith.mulf %15, %14 : vector<8x1xf32>
    %cst_6 = arith.constant 2.000000e+00 : f32
    %17 = vector.broadcast %cst_6 : f32 to vector<8x1xf32>
    %18 = arith.subf %17, %16 : vector<8x1xf32>
    %19 = vector.shape_cast %18 : vector<8x1xf32> to vector<1x8x1xf32>
    %cst_7 = arith.constant dense<0.000000e+00> : vector<1xf32>
    %20 = vector.multi_reduction <add>, %19, %cst_7 [1, 2] : vector<1x8x1xf32> to vector<1xf32>
    %21 = vector.shape_cast %20 : vector<1xf32> to vector<1x1x1xf32>
    %22 = vector.extract %21[0, 0, 0] : f32 from vector<1x1x1xf32>
    %23 = vector.broadcast %22 : f32 to vector<1x8x128xf32>
    %c0_8 = arith.constant 0 : index
    %c0_9 = arith.constant 0 : index
    %c0_10 = arith.constant 0 : index
    %24 = vector.load %arg3[%c0_8, %c0_9, %c0_10] : memref<1x8x128xf32, #tpu.memory_space<vmem>>, vector<1x8x128xf32>
    tpu.vector_store %arg3[%c0_8, %c0_9, %c0_10], %23 {strides = array<i32>} : memref<1x8x128xf32, #tpu.memory_space<vmem>>, vector<1x8x128xf32>,
    return
  }
  func.func @transform_0(%arg0: i32) -> (i32, i32) {
    %c0_i32 = arith.constant 0 : i32
    %c0_i32_0 = arith.constant 0 : i32
    return %arg0, %c0_i32 : i32, i32
  }
  func.func @transform_1(%arg0: i32) -> (i32, i32) {
    %c0_i32 = arith.constant 0 : i32
    %c0_i32_0 = arith.constant 0 : i32
    return %arg0, %c0_i32 : i32, i32
  }
  func.func @transform_2(%arg0: i32) -> (i32, i32, i32) {
    %c0_i32 = arith.constant 0 : i32
    %c0_i32_0 = arith.constant 0 : i32
    %c0_i32_1 = arith.constant 0 : i32
    return %arg0, %c0_i32, %c0_i32_0 : i32, i32, i32
  }
}

</mosaic_0001>

<llo_original>
// kernel: tpu_custom_call.1
$region0: #{tpu_custom_call.1}
  #allocation0 [shape = 'u32[]', space=smem, size = 0x4, offset = 0x4, fixed_abs, tag = 'smem constant byte address 0x4 - core index']
  #allocation1 [shape = 'u32[144,128]{1,0:T(1,128)}', space=vmem, size = 0x12000, scoped, tag = 'internal scratch']
  %s0 = inlined_call_operand.hbm [shape: f32[8,128], index: 0, kind: input, shape index: {}]
  %s1 = inlined_call_operand.hbm [shape: f32[8,128], index: 1, kind: input, shape index: {}]
  %s2 = inlined_call_operand.hbm [shape: f32[1,8,128], index: 2, kind: output, shape index: {}]
  %s3 = sld [smem:[#allocation0]]
  $region26: #{tpu_custom_call.1} parent=0
    _
  %s5 = ssub.s32 1, %s3
  %s6 = scalar_select 0, %s5, %s3
  $region1: #{tpu_custom_call.1} parent=0
    #allocation2 [shape = 'u8[4096]{0}', space=vmem, size = 0x1000, scoped, tag = 'input window, operand 0, single buffered']
    #allocation3 [shape = 's32[1]{0}', space=sflag, size = 0x4, scoped, tag = 'scoped memory for tpu_custom_call.1']
    #allocation4 [shape = 's32[1]{0}', space=sflag, size = 0x4, scoped, tag = 'scoped memory for tpu_custom_call.1']
    #allocation5 [shape = 'u8[4096]{0}', space=vmem, size = 0x1000, scoped, tag = 'input window, operand 1, single buffered']
    #allocation6 [shape = 's32[1]{0}', space=sflag, size = 0x4, scoped, tag = 'scoped memory for tpu_custom_call.1']
    #allocation7 [shape = 'u8[4096]{0}', space=vmem, size = 0x1000, scoped, tag = 'output window, operand 0, single buffered']
    %7 = vsyncpa [#allocation3], 0
    %8 = vsyncpa [#allocation6], 0
    %9 = vsyncpa [#allocation4], 0
    // Predicated region
    $region2: #{tpu_custom_call.1} parent=1 // pred_check
      _
    $region3: #{tpu_custom_call.1} parent=1 // pred_check_branch
      %11 = sbr.rel (0) target = $region5
    $region4: #{tpu_custom_call.1} parent=1 // pred_region
      %s13 = ssub.s32 128, 128
      %14 = vsyncadd [#allocation3], %s13
      %s16 = sshll.u32 [#allocation2], 4
      %s17 = int_to_ptr.vmem [resolvable:$true] %s16
      %19 = dma.hbm_to_vmem [thread:$0]  %s0, 128, %s17, [#allocation3]
    $region5: #{tpu_custom_call.1} parent=1 // pred_fallthru
      _
    // Predicated region
    $region6: #{tpu_custom_call.1} parent=1 // pred_check
      _
    $region7: #{tpu_custom_call.1} parent=1 // pred_check_branch
      %21 = sbr.rel (0) target = $region9
    $region8: #{tpu_custom_call.1} parent=1 // pred_region
      %s23 = ssub.s32 128, 128
      %24 = vsyncadd [#allocation6], %s23
      %s26 = sshll.u32 [#allocation5], 4
      %s27 = int_to_ptr.vmem [resolvable:$true] %s26
      %29 = dma.hbm_to_vmem [thread:$0]  %s1, 128, %s27, [#allocation6]
    $region9: #{tpu_custom_call.1} parent=1 // pred_fallthru
      _
    // Predicated region
    $region10: #{tpu_custom_call.1} parent=1 // pred_check
      _
    $region11: #{tpu_custom_call.1} parent=1 // pred_check_branch
      %31 = sbr.rel (0) target = $region13
    $region12: #{tpu_custom_call.1} parent=1 // pred_region
      %32 = dma.done [#allocation3], 128
    $region13: #{tpu_custom_call.1} parent=1 // pred_fallthru
      _
    // Predicated region
    $region14: #{tpu_custom_call.1} parent=1 // pred_check
      _
    $region15: #{tpu_custom_call.1} parent=1 // pred_check_branch
      %34 = sbr.rel (0) target = $region17
    $region16: #{tpu_custom_call.1} parent=1 // pred_region
      %35 = dma.done [#allocation6], 128
    $region17: #{tpu_custom_call.1} parent=1 // pred_fallthru
      _
    %v36 = vld [vmem:[#allocation2] sm:$0xff]
    %v37 = vld [vmem:[#allocation5] sm:$0xff]
    %v38 = vmul.f32 %v36, %v36
    %39 = vadd.xlane.f32.xlu0 %v38
    %v40 = vpop.xlane.xlu0 %39
    %v41 = vmul.f32 %v37, %v37
    %42 = vadd.xlane.f32.xlu0 %v41
    %v43 = vpop.xlane.xlu0 %42
    %v44 = vmul.f32 %v36, %v37
    %45 = vadd.xlane.f32.xlu0 %v44
    %v46 = vpop.xlane.xlu0 %45
    %v47 = vrsqrt.pop %v40
    %v48 = vmul.f32 %v46, %v47
    %v49 = vrsqrt.pop %v43
    %v50 = vmul.f32 %v48, %v49
    %v51 = vmul.f32 %v50, 2.0
    %v52 = vsub.f32 2.0, %v51
    %vm53 = vcmask 7168
    %v54 = vsel %vm53, %v52, 0.0
    %55 = vadd.xlane.f32.xlu0 %v54
    %v56 = vpop.xlane.xlu0 %55
    %v57 = vrot.slane %v56, 4
    %v58 = vadd.f32 %v56, %v57
    %v59 = vrot.slane %v58, 2
    %v60 = vadd.f32 %v58, %v59
    %v61 = vrot.slane %v60, 1
    %v62 = vadd.f32 %v60, %v61
    %s63 = vtos %v62
    %v64 = vstv %s63
    %65 = vst [vmem:[#allocation7] sm:$0xff] %v64
    // Predicated region
    $region18: #{tpu_custom_call.1} parent=1 // pred_check
      _
    $region19: #{tpu_custom_call.1} parent=1 // pred_check_branch
      %67 = sbr.rel (0) target = $region21
    $region20: #{tpu_custom_call.1} parent=1 // pred_region
      %s69 = ssub.s32 128, 128
      %70 = vsyncadd [#allocation4], %s69
      %s72 = sshll.u32 [#allocation7], 4
      %s73 = int_to_ptr.vmem [resolvable:$true] %s72
      %75 = dma.vmem_to_hbm [thread:$0]  %s73, 128, %s2, [#allocation4]
    $region21: #{tpu_custom_call.1} parent=1 // pred_fallthru
      _
    // Predicated region
    $region22: #{tpu_custom_call.1} parent=1 // pred_check
      _
    $region23: #{tpu_custom_call.1} parent=1 // pred_check_branch
      %77 = sbr.rel (0) target = $region25
    $region24: #{tpu_custom_call.1} parent=1 // pred_region
      %78 = dma.done [#allocation4], 128
    $region25: #{tpu_custom_call.1} parent=1 // pred_fallthru
      _
    %79 = vsyncpa [#allocation3], 1
    %80 = vsyncpa [#allocation6], 1
    %81 = vsyncpa [#allocation4], 1

</llo_original>
